<compile_context>
chip_gen: v7x
topology: tpu7x:2x2x1
jax: 0.10.0
libtpu: 0.0.40
codegen_flags: <defaults>
</compile_context>

<pallas_src>
import functools

import jax
import jax.numpy as jnp
from jax.experimental import pallas as pl
from jax.experimental.pallas import tpu as pltpu


def _klcom_kernel(logits_ref, targets_ref, ce_ref, kl_ref, *,
                  inv_T, n_valid, needs_mask):
    i = pl.program_id(0)
    logits = logits_ref[...].astype(jnp.float32)    # (TN, C)
    targets = targets_ref[...].astype(jnp.float32)  # (TN, C)
    tn, c = logits.shape

    if needs_mask:
        # Rows of the (partial) last block that lie beyond N contain undefined
        # data; zero them BEFORE any exp so they cannot poison the sums.
        row = jax.lax.broadcasted_iota(jnp.int32, (tn, 1), 0) + i * tn
        valid = row < n_valid                       # (TN, 1) bool
        validf = valid.astype(jnp.float32)
        logits = jnp.where(valid, logits, 0.0)
        targets = jnp.where(valid, targets, 0.0)

    # ---- teacher tempered scores: only exp + two row reductions ----
    t_scaled = targets if inv_T == 1.0 else targets * inv_T
    t_max = jnp.max(t_scaled, axis=1, keepdims=True)
    t_exp = jnp.exp(t_scaled - t_max)
    t_sum = jnp.sum(t_exp, axis=1, keepdims=True)
    t_lse = t_max + jnp.log(t_sum)                  # teacher tempered LSE

    # ---- student untempered log-sum-exp (CE) ----
    l_max = jnp.max(logits, axis=1, keepdims=True)
    l_sumexp = jnp.sum(jnp.exp(logits - l_max), axis=1, keepdims=True)
    l_lse = l_max + jnp.log(l_sumexp)               # (TN, 1)

    # ---- student tempered log-sum-exp (KL); reuse untempered pass if T==1 ----
    if inv_T == 1.0:
        s_scaled = logits
        s_lse = l_lse
    else:
        s_scaled = logits * inv_T
        s_max = jnp.max(s_scaled, axis=1, keepdims=True)
        s_sumexp = jnp.sum(jnp.exp(s_scaled - s_max), axis=1, keepdims=True)
        s_lse = s_max + jnp.log(s_sumexp)

    # ---- fused KL(teacher || student_T) per row ----
    #   sum_c p_t * (log p_t - log p_s_T)
    # = sum_c t_exp * (t_scaled - s_scaled) / t_sum - t_lse + s_lse
    kl_row = (jnp.sum(t_exp * (t_scaled - s_scaled), axis=1, keepdims=True)
              * pl.reciprocal(t_sum, approx=False)
              - t_lse + s_lse)                      # (TN, 1)

    # ---- CE(logits, argmax(teacher)): softmax is monotone, so argmax of the
    #      teacher probs == argmax of t_scaled.  Select the student logit at a
    #      teacher-max position via a masked max (no int iota chain). ----
    sel_logit = jnp.max(jnp.where(t_scaled >= t_max, logits, -jnp.inf),
                        axis=1, keepdims=True)
    ce_row = l_lse - sel_logit                      # -log_softmax(logits)[i, argmax]

    if needs_mask:
        kl_row = kl_row * validf
        ce_row = ce_row * validf

    ce_tile = jnp.sum(ce_row)
    kl_tile = jnp.sum(kl_row)

    # Lane-dense, unmasked stores of the per-tile partial sums.
    ce_ref[...] = jnp.ones(ce_ref.shape, jnp.float32) * ce_tile
    kl_ref[...] = jnp.ones(kl_ref.shape, jnp.float32) * kl_tile


def _vmem_capacity_bytes(default=128 * 1024 * 1024):
    try:
        info = pltpu.get_tpu_info()
        cap = getattr(info, "vmem_capacity_bytes", None)
        if cap:
            return int(cap)
    except Exception:
        pass
    return default


def _choose_block_rows(n, c, in_itemsize, vmem_budget_bytes):
    """Pick a row tile: 2 inputs x 2 pipeline buffers + ~10 f32 temporaries."""
    per_row = c * (2 * 2 * in_itemsize + 10 * 4)
    tn = vmem_budget_bytes // max(per_row, 1)
    tn = max(8, min(2048, (tn // 8) * 8))
    # Guarantee >= 2 grid tiles whenever the batch allows it so the
    # ("parallel",) grid axis is sharded across both TensorCores on v7x
    # (negligible ~0.35us/step cost on single-TC v5e/v6e).
    half_rows = max(8, ((-(-n // 2)) + 7) // 8 * 8)
    return min(tn, half_rows)


def klcom_pallas(logits, targets, T=1.0, alpha1=1.0, alpha2=1.0,
                 reduction="batchmean"):
    assert reduction == "batchmean"  # TODO(synk): other kl_div reductions not implemented
    n, c = logits.shape
    in_itemsize = max(jnp.dtype(logits.dtype).itemsize,
                      jnp.dtype(targets.dtype).itemsize)

    vmem_cap = _vmem_capacity_bytes()
    tile_budget = max(8 * 1024 * 1024, int(vmem_cap * 0.4))
    vmem_limit = min(int(vmem_cap * 0.75), 96 * 1024 * 1024)

    tn = _choose_block_rows(n, c, in_itemsize, tile_budget)
    num_tiles = pl.cdiv(n, tn)
    needs_mask = (num_tiles * tn != n)   # ragged tail handled in-kernel, no pad copy

    t = float(T)
    cost = pl.CostEstimate(
        flops=18 * n * c,
        transcendentals=(2 if t == 1.0 else 3) * n * c,
        bytes_accessed=n * c * (jnp.dtype(logits.dtype).itemsize
                                + jnp.dtype(targets.dtype).itemsize)
        + 2 * num_tiles * 8 * 128 * 4,
    )

    kernel = functools.partial(_klcom_kernel, inv_T=1.0 / t, n_valid=n,
                               needs_mask=needs_mask)

    ce_parts, kl_parts = pl.pallas_call(
        kernel,
        out_shape=(
            jax.ShapeDtypeStruct((num_tiles, 8, 128), jnp.float32),
            jax.ShapeDtypeStruct((num_tiles, 8, 128), jnp.float32),
        ),
        grid=(num_tiles,),
        in_specs=[
            pl.BlockSpec((tn, c), lambda i: (i, 0)),
            pl.BlockSpec((tn, c), lambda i: (i, 0)),
        ],
        out_specs=(
            pl.BlockSpec((1, 8, 128), lambda i: (i, 0, 0)),
            pl.BlockSpec((1, 8, 128), lambda i: (i, 0, 0)),
        ),
        compiler_params=pltpu.CompilerParams(
            dimension_semantics=("parallel",),
            vmem_limit_bytes=vmem_limit,
        ),
        cost_estimate=cost,
    )(logits, targets)

    loss_ce = jnp.sum(ce_parts[:, 0, 0]) / n
    loss_kl = jnp.sum(kl_parts[:, 0, 0]) / n
    loss = alpha1 * loss_ce + alpha2 * (t * t) * loss_kl
    return loss, loss_ce, loss_kl


def klcom_ref(logits, targets, T=1.0, alpha1=1.0, alpha2=1.0):
    """Pure-JAX reference mirroring the PyTorch klcom()."""
    teacher_probs = jax.nn.softmax(targets / T, axis=1)
    tgt_idx = jnp.argmax(teacher_probs, axis=1)
    log_probs = jax.nn.log_softmax(logits, axis=1)
    loss_ce = -jnp.mean(jnp.take_along_axis(log_probs, tgt_idx[:, None], axis=1))
    log_probs_T = jax.nn.log_softmax(logits / T, axis=1)
    kl_elem = teacher_probs * (jnp.log(teacher_probs) - log_probs_T)
    loss_kl = jnp.sum(kl_elem) / logits.shape[0]
    return alpha1 * loss_ce + alpha2 * (T * T) * loss_kl, loss_ce, loss_kl


if __name__ == "__main__":
    key = jax.random.PRNGKey(0)

    # Case 1: small aligned shape, T == 1 (reused log-sum-exp path).
    k1, k2 = jax.random.split(key)
    N, C = 8, 32
    logits = jax.random.normal(k1, (N, C), dtype=jnp.float32)
    targets = jax.random.normal(k2, (N, C), dtype=jnp.float32)
    T, alpha1, alpha2 = 1.0, 1.0, 1.0
    loss, loss_ce, loss_kl = klcom_pallas(logits, targets, T=T,
                                          alpha1=alpha1, alpha2=alpha2)
    loss = jax.block_until_ready(loss)
    ref_loss, ref_ce, ref_kl = klcom_ref(logits, targets, T=T,
                                         alpha1=alpha1, alpha2=alpha2)
    assert jnp.allclose(loss, ref_loss, atol=1e-5, rtol=1e-5), (loss, ref_loss)
    assert jnp.allclose(loss_ce, ref_ce, atol=1e-5, rtol=1e-5)
    assert jnp.allclose(loss_kl, ref_kl, atol=1e-5, rtol=1e-5)
    print(f"[klcom] ce:{float(loss_ce)}, kl:{float(T * T * loss_kl)}")

    # Case 2: non-multiple-of-tile batch (exercises the in-kernel ragged-tail
    # mask with no wrapper-side pad) and T != 1 (tempered student pass).
    k3, k4 = jax.random.split(k1)
    N2, C2 = 13, 32
    logits2 = jax.random.normal(k3, (N2, C2), dtype=jnp.float32)
    targets2 = jax.random.normal(k4, (N2, C2), dtype=jnp.float32)
    T2 = 2.0
    loss2, ce2, kl2 = klcom_pallas(logits2, targets2, T=T2, alpha1=0.5, alpha2=1.5)
    loss2 = jax.block_until_ready(loss2)
    ref2, rce2, rkl2 = klcom_ref(logits2, targets2, T=T2, alpha1=0.5, alpha2=1.5)
    assert jnp.allclose(loss2, ref2, atol=1e-5, rtol=1e-5), (loss2, ref2)
    assert jnp.allclose(ce2, rce2, atol=1e-5, rtol=1e-5)
    assert jnp.allclose(kl2, rkl2, atol=1e-5, rtol=1e-5)

    print("KERNEL_OK")
</pallas_src>

<mosaic_0001>
module attributes {stable_mosaic.version = 11 : i64} {
  func.func @_klcom_kernel(%arg0: i32, %arg1: memref<8x32xf32, #tpu.memory_space<vmem>>, %arg2: memref<8x32xf32, #tpu.memory_space<vmem>>, %arg3: memref<1x8x128xf32, #tpu.memory_space<vmem>>, %arg4: memref<1x8x128xf32, #tpu.memory_space<vmem>>) attributes {dimension_semantics = [#tpu.dimension_semantics<parallel>], iteration_bounds = array<i64: 1>, scalar_prefetch = 0 : i64, scratch_operands = 0 : i64, tpu.core_type = #tpu.core_type<tc>, window_params = [{transform_indices = @transform_0, window_bounds = array<i64: 8, 32>}, {transform_indices = @transform_1, window_bounds = array<i64: 8, 32>}, {transform_indices = @transform_2, window_bounds = array<i64: 1, 8, 128>}, {transform_indices = @transform_3, window_bounds = array<i64: 1, 8, 128>}]} {
    %c0 = arith.constant 0 : index
    %c0_0 = arith.constant 0 : index
    %0 = vector.load %arg1[%c0, %c0_0] : memref<8x32xf32, #tpu.memory_space<vmem>>, vector<8x32xf32>
    %c0_1 = arith.constant 0 : index
    %c0_2 = arith.constant 0 : index
    %1 = vector.load %arg2[%c0_1, %c0_2] : memref<8x32xf32, #tpu.memory_space<vmem>>, vector<8x32xf32>
    %cst = arith.constant dense<0xFF800000> : vector<8xf32>
    %2 = vector.multi_reduction <maximumf>, %1, %cst [1] : vector<8x32xf32> to vector<8xf32>
    %3 = vector.shape_cast %2 : vector<8xf32> to vector<8x1xf32>
    %4 = vector.broadcast %3 : vector<8x1xf32> to vector<8x32xf32>
    %5 = arith.subf %1, %4 : vector<8x32xf32>
    %6 = math.exp %5 : vector<8x32xf32>
    %cst_3 = arith.constant dense<0.000000e+00> : vector<8xf32>
    %7 = vector.multi_reduction <add>, %6, %cst_3 [1] : vector<8x32xf32> to vector<8xf32>
    %8 = vector.shape_cast %7 : vector<8xf32> to vector<8x1xf32>
    %9 = math.log %8 : vector<8x1xf32>
    %10 = arith.addf %3, %9 : vector<8x1xf32>
    %cst_4 = arith.constant dense<0xFF800000> : vector<8xf32>
    %11 = vector.multi_reduction <maximumf>, %0, %cst_4 [1] : vector<8x32xf32> to vector<8xf32>
    %12 = vector.shape_cast %11 : vector<8xf32> to vector<8x1xf32>
    %13 = vector.broadcast %12 : vector<8x1xf32> to vector<8x32xf32>
    %14 = arith.subf %0, %13 : vector<8x32xf32>
    %15 = math.exp %14 : vector<8x32xf32>
    %cst_5 = arith.constant dense<0.000000e+00> : vector<8xf32>
    %16 = vector.multi_reduction <add>, %15, %cst_5 [1] : vector<8x32xf32> to vector<8xf32>
    %17 = vector.shape_cast %16 : vector<8xf32> to vector<8x1xf32>
    %18 = math.log %17 : vector<8x1xf32>
    %19 = arith.addf %12, %18 : vector<8x1xf32>
    %20 = arith.subf %1, %0 : vector<8x32xf32>
    %21 = arith.mulf %6, %20 : vector<8x32xf32>
    %cst_6 = arith.constant dense<0.000000e+00> : vector<8xf32>
    %22 = vector.multi_reduction <add>, %21, %cst_6 [1] : vector<8x32xf32> to vector<8xf32>
    %23 = vector.shape_cast %22 : vector<8xf32> to vector<8x1xf32>
    %24 = tpu.reciprocal %8 : vector<8x1xf32> -> vector<8x1xf32>
    %25 = arith.mulf %23, %24 : vector<8x1xf32>
    %26 = arith.subf %25, %10 : vector<8x1xf32>
    %27 = arith.addf %26, %19 : vector<8x1xf32>
    %28 = vector.broadcast %3 : vector<8x1xf32> to vector<8x32xf32>
    %29 = arith.cmpf oge, %1, %28 : vector<8x32xf32>
    %cst_7 = arith.constant 0xFF800000 : f32
    %30 = vector.broadcast %cst_7 : f32 to vector<8x32xf32>
    %31 = arith.select %29, %0, %30 : vector<8x32xi1>, vector<8x32xf32>
    %cst_8 = arith.constant dense<0xFF800000> : vector<8xf32>
    %32 = vector.multi_reduction <maximumf>, %31, %cst_8 [1] : vector<8x32xf32> to vector<8xf32>
    %33 = vector.shape_cast %32 : vector<8xf32> to vector<8x1xf32>
    %34 = arith.subf %19, %33 : vector<8x1xf32>
    %35 = vector.shape_cast %34 : vector<8x1xf32> to vector<1x8x1xf32>
    %cst_9 = arith.constant dense<0.000000e+00> : vector<1xf32>
    %36 = vector.multi_reduction <add>, %35, %cst_9 [1, 2] : vector<1x8x1xf32> to vector<1xf32>
    %37 = vector.shape_cast %36 : vector<1xf32> to vector<1x1x1xf32>
    %38 = vector.extract %37[0, 0, 0] : f32 from vector<1x1x1xf32>
    %39 = vector.shape_cast %27 : vector<8x1xf32> to vector<1x8x1xf32>
    %cst_10 = arith.constant dense<0.000000e+00> : vector<1xf32>
    %40 = vector.multi_reduction <add>, %39, %cst_10 [1, 2] : vector<1x8x1xf32> to vector<1xf32>
    %41 = vector.shape_cast %40 : vector<1xf32> to vector<1x1x1xf32>
    %42 = vector.extract %41[0, 0, 0] : f32 from vector<1x1x1xf32>
    %cst_11 = arith.constant 1.000000e+00 : f32
    %43 = vector.broadcast %cst_11 : f32 to vector<1x8x128xf32>
    %44 = vector.broadcast %38 : f32 to vector<1x8x128xf32>
    %45 = arith.mulf %43, %44 : vector<1x8x128xf32>
    %c0_12 = arith.constant 0 : index
    %c0_13 = arith.constant 0 : index
    %c0_14 = arith.constant 0 : index
    %46 = vector.load %arg3[%c0_12, %c0_13, %c0_14] : memref<1x8x128xf32, #tpu.memory_space<vmem>>, vector<1x8x128xf32>
    tpu.vector_store %arg3[%c0_12, %c0_13, %c0_14], %45 {strides = array<i32>} : memref<1x8x128xf32, #tpu.memory_space<vmem>>, vector<1x8x128xf32>,
    %cst_15 = arith.constant 1.000000e+00 : f32
    %47 = vector.broadcast %cst_15 : f32 to vector<1x8x128xf32>
    %48 = vector.broadcast %42 : f32 to vector<1x8x128xf32>
    %49 = arith.mulf %47, %48 : vector<1x8x128xf32>
    %c0_16 = arith.constant 0 : index
    %c0_17 = arith.constant 0 : index
    %c0_18 = arith.constant 0 : index
    %50 = vector.load %arg4[%c0_16, %c0_17, %c0_18] : memref<1x8x128xf32, #tpu.memory_space<vmem>>, vector<1x8x128xf32>
    tpu.vector_store %arg4[%c0_16, %c0_17, %c0_18], %49 {strides = array<i32>} : memref<1x8x128xf32, #tpu.memory_space<vmem>>, vector<1x8x128xf32>,
    return
  }
  func.func @transform_0(%arg0: i32) -> (i32, i32) {
    %c0_i32 = arith.constant 0 : i32
    %c0_i32_0 = arith.constant 0 : i32
    return %arg0, %c0_i32 : i32, i32
  }
  func.func @transform_1(%arg0: i32) -> (i32, i32) {
    %c0_i32 = arith.constant 0 : i32
    %c0_i32_0 = arith.constant 0 : i32
    return %arg0, %c0_i32 : i32, i32
  }
  func.func @transform_2(%arg0: i32) -> (i32, i32, i32) {
    %c0_i32 = arith.constant 0 : i32
    %c0_i32_0 = arith.constant 0 : i32
    %c0_i32_1 = arith.constant 0 : i32
    return %arg0, %c0_i32, %c0_i32_0 : i32, i32, i32
  }
  func.func @transform_3(%arg0: i32) -> (i32, i32, i32) {
    %c0_i32 = arith.constant 0 : i32
    %c0_i32_0 = arith.constant 0 : i32
    %c0_i32_1 = arith.constant 0 : i32
    return %arg0, %c0_i32, %c0_i32_0 : i32, i32, i32
  }
}

</mosaic_0001>

<llo_original>
// kernel: tpu_custom_call.1
$region0: #{tpu_custom_call.1}
  #allocation0 [shape = 'u32[]', space=smem, size = 0x4, offset = 0x4, fixed_abs, tag = 'smem constant byte address 0x4 - core index']
  #allocation1 [shape = 'u32[144,128]{1,0:T(1,128)}', space=vmem, size = 0x12000, scoped, tag = 'internal scratch']
  %s0 = inlined_call_operand.hbm [shape: f32[8,32], index: 0, kind: input, shape index: {}]
  %s1 = inlined_call_operand.hbm [shape: f32[8,32], index: 1, kind: input, shape index: {}]
  %s2 = inlined_call_operand.hbm [shape: f32[1,8,128], index: 2, kind: output, shape index: {0}]
  %s3 = inlined_call_operand.hbm [shape: f32[1,8,128], index: 3, kind: output, shape index: {1}]
  %4 = xla_tuple %s2, %s3
  %s5 = sld [smem:[#allocation0]]
  $region34: #{tpu_custom_call.1} parent=0
    _
  %s7 = ssub.s32 1, %s5
  %s8 = scalar_select 0, %s7, %s5
  $region1: #{tpu_custom_call.1} parent=0
    #allocation2 [shape = 'u8[4096]{0}', space=vmem, size = 0x1000, scoped, tag = 'input window, operand 0, single buffered']
    #allocation3 [shape = 's32[1]{0}', space=sflag, size = 0x4, scoped, tag = 'scoped memory for tpu_custom_call.1']
    #allocation4 [shape = 's32[1]{0}', space=sflag, size = 0x4, scoped, tag = 'scoped memory for tpu_custom_call.1']
    #allocation5 [shape = 'u8[4096]{0}', space=vmem, size = 0x1000, scoped, tag = 'input window, operand 1, single buffered']
    #allocation6 [shape = 's32[1]{0}', space=sflag, size = 0x4, scoped, tag = 'scoped memory for tpu_custom_call.1']
    #allocation7 [shape = 'u8[4096]{0}', space=vmem, size = 0x1000, scoped, tag = 'output window, operand 0, single buffered']
    #allocation8 [shape = 'u8[4096]{0}', space=vmem, size = 0x1000, scoped, tag = 'output window, operand 1, single buffered']
    #allocation9 [shape = 's32[1]{0}', space=sflag, size = 0x4, scoped, tag = 'scoped memory for tpu_custom_call.1']
    %9 = vsyncpa [#allocation3], 0
    %10 = vsyncpa [#allocation6], 0
    %11 = vsyncpa [#allocation4], 0
    %12 = vsyncpa [#allocation9], 0
    // Predicated region
    $region2: #{tpu_custom_call.1} parent=1 // pred_check
      _
    $region3: #{tpu_custom_call.1} parent=1 // pred_check_branch
      %14 = sbr.rel (0) target = $region5
    $region4: #{tpu_custom_call.1} parent=1 // pred_region
      %s16 = ssub.s32 128, 128
      %17 = vsyncadd [#allocation3], %s16
      %s19 = sshll.u32 [#allocation2], 4
      %s20 = int_to_ptr.vmem [resolvable:$true] %s19
      %22 = dma.hbm_to_vmem [thread:$0]  %s0, 128, %s20, [#allocation3]
    $region5: #{tpu_custom_call.1} parent=1 // pred_fallthru
      _
    // Predicated region
    $region6: #{tpu_custom_call.1} parent=1 // pred_check
      _
    $region7: #{tpu_custom_call.1} parent=1 // pred_check_branch
      %24 = sbr.rel (0) target = $region9
    $region8: #{tpu_custom_call.1} parent=1 // pred_region
      %s26 = ssub.s32 128, 128
      %27 = vsyncadd [#allocation6], %s26
      %s29 = sshll.u32 [#allocation5], 4
      %s30 = int_to_ptr.vmem [resolvable:$true] %s29
      %32 = dma.hbm_to_vmem [thread:$0]  %s1, 128, %s30, [#allocation6]
    $region9: #{tpu_custom_call.1} parent=1 // pred_fallthru
      _
    // Predicated region
    $region10: #{tpu_custom_call.1} parent=1 // pred_check
      _
    $region11: #{tpu_custom_call.1} parent=1 // pred_check_branch
      %34 = sbr.rel (0) target = $region13
    $region12: #{tpu_custom_call.1} parent=1 // pred_region
      %35 = dma.done [#allocation3], 128
    $region13: #{tpu_custom_call.1} parent=1 // pred_fallthru
      _
    // Predicated region
    $region14: #{tpu_custom_call.1} parent=1 // pred_check
      _
    $region15: #{tpu_custom_call.1} parent=1 // pred_check_branch
      %37 = sbr.rel (0) target = $region17
    $region16: #{tpu_custom_call.1} parent=1 // pred_region
      %38 = dma.done [#allocation6], 128
    $region17: #{tpu_custom_call.1} parent=1 // pred_fallthru
      _
    %v39 = vld [vmem:[#allocation2] sm:$0xff]
    %v40 = vld [vmem:[#allocation5] sm:$0xff]
    %vm41 = vcmask 261120
    %v42 = vsel %vm41, %v40, -inf
    %43 = vmax.xlane.f32.xlu0 %v42
    %v44 = vpop.xlane.xlu0 %43
    %v45 = vsub.f32 %v40, %v44
    %v46 = vmul.f32 %v45, 1.442695
    %v47 = vpow.pop %v46
    %v48 = vsel %vm41, %v47, 0.0
    %49 = vadd.xlane.f32.xlu0 %v48
    %v50 = vpop.xlane.xlu0 %49
    %v51 = vlog2.pop %v50
    %v52 = vmul.f32 %v51, 0.6931472
    %v53 = vadd.f32 %v44, %v52
    %v54 = vsel %vm41, %v39, -inf
    %55 = vmax.xlane.f32.xlu0 %v54
    %v56 = vpop.xlane.xlu0 %55
    %v57 = vsub.f32 %v39, %v56
    %v58 = vmul.f32 %v57, 1.442695
    %v59 = vpow.pop %v58
    %v60 = vsel %vm41, %v59, 0.0
    %61 = vadd.xlane.f32.xlu0 %v60
    %v62 = vpop.xlane.xlu0 %61
    %v63 = vlog2.pop %v62
    %v64 = vmul.f32 %v63, 0.6931472
    %v65 = vadd.f32 %v56, %v64
    %v66 = vsub.f32 %v40, %v39
    %v67 = vmul.f32 %v47, %v66
    %v68 = vsel %vm41, %v67, 0.0
    %69 = vadd.xlane.f32.xlu0 %v68
    %v70 = vpop.xlane.xlu0 %69
    %v71 = vrcp.pop %v50
    %v72 = vmul.f32 %v70, %v71
    %v73 = vsub.f32 %v72, %v53
    %v74 = vadd.f32 %v73, %v65
    %vm75 = vcmp.ge.f32.partialorder %v40, %v44
    %v76 = vsel %vm75, %v39, -inf
    %v77 = vsel %vm41, %v76, -inf
    %78 = vmax.xlane.f32.xlu0 %v77
    %v79 = vpop.xlane.xlu0 %78
    %v80 = vsub.f32 %v65, %v79
    %vm81 = vcmask 7168
    %v82 = vsel %vm81, %v80, 0.0
    %83 = vadd.xlane.f32.xlu0 %v82
    %v84 = vpop.xlane.xlu0 %83
    %v85 = vrot.slane %v84, 4
    %v86 = vadd.f32 %v84, %v85
    %v87 = vrot.slane %v86, 2
    %v88 = vadd.f32 %v86, %v87
    %v89 = vrot.slane %v88, 1
    %v90 = vadd.f32 %v88, %v89
    %s91 = vtos %v90
    %v92 = vsel %vm81, %v74, 0.0
    %93 = vadd.xlane.f32.xlu0 %v92
    %v94 = vpop.xlane.xlu0 %93
    %v95 = vrot.slane %v94, 4
    %v96 = vadd.f32 %v94, %v95
    %v97 = vrot.slane %v96, 2
    %v98 = vadd.f32 %v96, %v97
    %v99 = vrot.slane %v98, 1
    %v100 = vadd.f32 %v98, %v99
    %s101 = vtos %v100
    %v102 = vstv %s91
    %103 = vst [vmem:[#allocation7] sm:$0xff] %v102
    %v104 = vstv %s101
    %105 = vst [vmem:[#allocation8] sm:$0xff] %v104
    // Predicated region
    $region18: #{tpu_custom_call.1} parent=1 // pred_check
      _
    $region19: #{tpu_custom_call.1} parent=1 // pred_check_branch
      %107 = sbr.rel (0) target = $region21
    $region20: #{tpu_custom_call.1} parent=1 // pred_region
      %s109 = ssub.s32 128, 128
      %110 = vsyncadd [#allocation4], %s109
      %s112 = sshll.u32 [#allocation7], 4
      %s113 = int_to_ptr.vmem [resolvable:$true] %s112
      %115 = dma.vmem_to_hbm [thread:$0]  %s113, 128, %s2, [#allocation4]
    $region21: #{tpu_custom_call.1} parent=1 // pred_fallthru
      _
    // Predicated region
    $region22: #{tpu_custom_call.1} parent=1 // pred_check
      _
    $region23: #{tpu_custom_call.1} parent=1 // pred_check_branch
      %117 = sbr.rel (0) target = $region25
    $region24: #{tpu_custom_call.1} parent=1 // pred_region
      %s119 = ssub.s32 128, 128
      %120 = vsyncadd [#allocation9], %s119
      %s122 = sshll.u32 [#allocation8], 4
      %s123 = int_to_ptr.vmem [resolvable:$true] %s122
      %125 = dma.vmem_to_hbm [thread:$0]  %s123, 128, %s3, [#allocation9]
    $region25: #{tpu_custom_call.1} parent=1 // pred_fallthru
      _
    // Predicated region
    $region26: #{tpu_custom_call.1} parent=1 // pred_check
      _
    $region27: #{tpu_custom_call.1} parent=1 // pred_check_branch
      %127 = sbr.rel (0) target = $region29
    $region28: #{tpu_custom_call.1} parent=1 // pred_region
      %128 = dma.done [#allocation4], 128
    $region29: #{tpu_custom_call.1} parent=1 // pred_fallthru
      _
    // Predicated region
    $region30: #{tpu_custom_call.1} parent=1 // pred_check
      _
    $region31: #{tpu_custom_call.1} parent=1 // pred_check_branch
      %130 = sbr.rel (0) target = $region33
    $region32: #{tpu_custom_call.1} parent=1 // pred_region
      %131 = dma.done [#allocation9], 128
    $region33: #{tpu_custom_call.1} parent=1 // pred_fallthru
      _
    %132 = vsyncpa [#allocation3], 1
    %133 = vsyncpa [#allocation6], 1
    %134 = vsyncpa [#allocation4], 1
    %135 = vsyncpa [#allocation9], 1

</llo_original>
